<compile_context>
chip_gen: v6e
topology: v6e:2x2x1
jax: 0.10.0
libtpu: 0.0.40
codegen_flags: <defaults>
</compile_context>

<pallas_src>
import jax
import jax.numpy as jnp
from jax import lax
from jax.experimental import pallas as pl
from jax.experimental.pallas import tpu as pltpu

N_ROUTING_ITER = 3


def _squash(x):
    # squash(x) = x / ||x|| * (||x||^2 / (1 + ||x||^2)), norm over the last axis.
    # rsqrt + reciprocal keep the work on the EUP instead of a sqrt-then-divide VALU chain.
    # (No epsilon, matching the PyTorch original: zero-norm rows would NaN there too.)
    sq = jnp.sum(x * x, axis=-1, keepdims=True)
    inv_norm = lax.rsqrt(sq)
    return x * (inv_norm * sq * pl.reciprocal(1.0 + sq, approx=False))


def induction_kernel(z_ref, w_ref, b_ref, out_ref):
    # z_ref:  (C*K, H)  support embeddings, classes flattened along rows
    # w_ref:  (H, H)    PyTorch Linear weight (out x in); transpose folded into dot_general
    # b_ref:  (1, H)    Linear bias
    # out_ref:(C, H)    class representatives
    C, H = out_ref.shape
    K = z_ref.shape[0] // C

    # y = z @ W.T + bias as one batched MXU push (contract z dim 1 with W's *input* dim 1).
    z_lin = lax.dot_general(
        z_ref[...], w_ref[...],
        dimension_numbers=(((1,), (1,)), ((), ())),
        preferred_element_type=jnp.float32,
    ) + b_ref[...]                                                     # (C*K, H)
    z3 = _squash(z_lin).reshape(C, K, H)                               # (C, K, H)

    # Routing iteration 0: softmax of all-zero logits is uniform 1/K -> plain mean.
    c = _squash(jnp.mean(z3, axis=1))                                  # (C, H)
    b_i = jnp.sum(z3 * c[:, None, :], axis=2)                          # (C, K)

    # Remaining routing iterations, vectorized over classes, fully unrolled.
    for it in range(1, N_ROUTING_ITER):
        # Max-free softmax: squashed rows and c all have norm < 1, so each logit update
        # is < 1 in magnitude and |b_i| < 2 -> exp cannot overflow. Skipping the max
        # subtraction removes cross-lane XLU work from the serial routing chain.
        e = jnp.exp(b_i)                                               # (C, K)
        d = e * pl.reciprocal(jnp.sum(e, axis=-1, keepdims=True), approx=False)
        c = _squash(jnp.sum(d[:, :, None] * z3, axis=1))               # (C, H)
        if it < N_ROUTING_ITER - 1:   # final logit update is never consumed
            b_i = b_i + jnp.sum(z3 * c[:, None, :], axis=2)

    out_ref[...] = c


@jax.jit
def induction_forward(z_s, W, bias):
    """z_s: (C, K, H) f32; W: (H, H) PyTorch Linear weight (out x in); bias: (H,)."""
    C, K, H = z_s.shape
    z2d = z_s.reshape(C * K, H)    # fuses under jit: one lane-dense 2-D input slab
    bias2 = bias.reshape(1, H)

    # Whole-array VMEM residents, no grid: a single kernel invocation over a few-KB
    # working set, with no pipeline machinery.
    # TODO(synk): when batching B episodes, stack to (B*C*K, H), add a leading grid axis
    # with dimension_semantics=("parallel",) (2 TCs on v7x), make the output lane-dense
    # (B, C*H == 128), and tile the matmul at 128 (v5e) / 256 (v6e, v7x) rows.
    vmem = pl.BlockSpec(memory_space=pltpu.MemorySpace.VMEM)
    return pl.pallas_call(
        induction_kernel,
        out_shape=jax.ShapeDtypeStruct((C, H), jnp.float32),
        in_specs=[vmem, vmem, vmem],
        out_specs=vmem,
    )(z2d, W, bias2)


def induction_reference(z_s, W, bias):
    # pure-JAX reference mirroring the PyTorch forward
    def squash(x):
        n = jnp.linalg.norm(x, axis=1, keepdims=True)
        return x / n * (n * n / (1.0 + n * n))

    C, K, H = z_s.shape
    reps = []
    for i in range(C):
        z_sq = squash(z_s[i] @ W.T + bias)
        b_i = jnp.zeros((K,), jnp.float32)
        c_i = None
        for _ in range(N_ROUTING_ITER):
            d_i = jax.nn.softmax(b_i, axis=-1)
            c_i = d_i @ z_sq
            c_i = squash(c_i.reshape(1, -1))
            b_i = b_i + (z_sq @ c_i.reshape(-1, 1)).reshape(-1)
        reps.append(c_i)
    return jnp.concatenate(reps, axis=0)


if __name__ == "__main__":
    C, K, H = 4, 8, 32                      # input_dim = hidden_dim = 32
    key = jax.random.PRNGKey(0)
    k_z, k_w, k_b = jax.random.split(key, 3)

    z_s = jax.random.normal(k_z, (C, K, H), dtype=jnp.float32)
    # deterministic Linear(input_dim, input_dim) params (synthetic, not a checkpoint)
    bound = 1.0 / jnp.sqrt(H)
    W = jax.random.uniform(k_w, (H, H), jnp.float32, -bound, bound)
    bias = jax.random.uniform(k_b, (H,), jnp.float32, -bound, bound)

    out = jax.block_until_ready(induction_forward(z_s, W, bias))
    ref = induction_reference(z_s, W, bias)

    assert out.shape == (C, H)
    # rsqrt/reciprocal (EUP) vs. the reference's norm+divide put the old 1e-5 check near
    # the f32 noise floor; 1e-4 (as suggested in review) is still tight for O(0.1-1) values.
    assert jnp.allclose(out, ref, atol=1e-4, rtol=1e-4), "mismatch vs reference"

    print("KERNEL_OK")
</pallas_src>

<mosaic_0001>
module attributes {stable_mosaic.version = 11 : i64} {
  func.func @induction_kernel(%arg0: memref<32x32xf32, #tpu.memory_space<vmem>>, %arg1: memref<32x32xf32, #tpu.memory_space<vmem>>, %arg2: memref<1x32xf32, #tpu.memory_space<vmem>>, %arg3: memref<4x32xf32, #tpu.memory_space<vmem>>) attributes {dimension_semantics = [], scalar_prefetch = 0 : i64, scratch_operands = 0 : i64, tpu.core_type = #tpu.core_type<tc>} {
    %c0 = arith.constant 0 : index
    %c0_0 = arith.constant 0 : index
    %0 = vector.load %arg0[%c0, %c0_0] : memref<32x32xf32, #tpu.memory_space<vmem>>, vector<32x32xf32>
    %c0_1 = arith.constant 0 : index
    %c0_2 = arith.constant 0 : index
    %1 = vector.load %arg1[%c0_1, %c0_2] : memref<32x32xf32, #tpu.memory_space<vmem>>, vector<32x32xf32>
    %cst = arith.constant dense<0.000000e+00> : vector<32x32xf32>
    %2 = tpu.matmul %0, %1, %cst {dimension_numbers = #tpu.dot_dimension_numbers<[1], [1], [0], [0], [0, 0, 1, 0], [], []>} : vector<32x32xf32>, vector<32x32xf32>, vector<32x32xf32> -> vector<32x32xf32>
    %c0_3 = arith.constant 0 : index
    %c0_4 = arith.constant 0 : index
    %3 = vector.load %arg2[%c0_3, %c0_4] : memref<1x32xf32, #tpu.memory_space<vmem>>, vector<1x32xf32>
    %4 = vector.broadcast %3 : vector<1x32xf32> to vector<32x32xf32>
    %5 = arith.addf %2, %4 : vector<32x32xf32>
    %6 = arith.mulf %5, %5 : vector<32x32xf32>
    %cst_5 = arith.constant dense<0.000000e+00> : vector<32xf32>
    %7 = vector.multi_reduction <add>, %6, %cst_5 [1] : vector<32x32xf32> to vector<32xf32>
    %8 = vector.shape_cast %7 : vector<32xf32> to vector<32x1xf32>
    %9 = math.rsqrt %8 : vector<32x1xf32>
    %10 = arith.mulf %9, %8 : vector<32x1xf32>
    %cst_6 = arith.constant 1.000000e+00 : f32
    %11 = vector.broadcast %cst_6 : f32 to vector<32x1xf32>
    %12 = arith.addf %11, %8 : vector<32x1xf32>
    %13 = tpu.reciprocal %12 : vector<32x1xf32> -> vector<32x1xf32>
    %14 = arith.mulf %10, %13 : vector<32x1xf32>
    %15 = vector.broadcast %14 : vector<32x1xf32> to vector<32x32xf32>
    %16 = arith.mulf %5, %15 : vector<32x32xf32>
    %17 = vector.shape_cast %16 : vector<32x32xf32> to vector<4x8x32xf32>
    %cst_7 = arith.constant dense<0.000000e+00> : vector<4x32xf32>
    %18 = vector.multi_reduction <add>, %17, %cst_7 [1] : vector<4x8x32xf32> to vector<4x32xf32>
    %cst_8 = arith.constant 8.000000e+00 : f32
    %19 = vector.broadcast %cst_8 : f32 to vector<4x32xf32>
    %20 = arith.divf %18, %19 : vector<4x32xf32>
    %21 = arith.mulf %20, %20 : vector<4x32xf32>
    %cst_9 = arith.constant dense<0.000000e+00> : vector<4xf32>
    %22 = vector.multi_reduction <add>, %21, %cst_9 [1] : vector<4x32xf32> to vector<4xf32>
    %23 = vector.shape_cast %22 : vector<4xf32> to vector<4x1xf32>
    %24 = math.rsqrt %23 : vector<4x1xf32>
    %25 = arith.mulf %24, %23 : vector<4x1xf32>
    %cst_10 = arith.constant 1.000000e+00 : f32
    %26 = vector.broadcast %cst_10 : f32 to vector<4x1xf32>
    %27 = arith.addf %26, %23 : vector<4x1xf32>
    %28 = tpu.reciprocal %27 : vector<4x1xf32> -> vector<4x1xf32>
    %29 = arith.mulf %25, %28 : vector<4x1xf32>
    %30 = vector.broadcast %29 : vector<4x1xf32> to vector<4x32xf32>
    %31 = arith.mulf %20, %30 : vector<4x32xf32>
    %32 = vector.shape_cast %31 : vector<4x32xf32> to vector<4x1x32xf32>
    %33 = vector.broadcast %32 : vector<4x1x32xf32> to vector<4x8x32xf32>
    %34 = arith.mulf %17, %33 : vector<4x8x32xf32>
    %cst_11 = arith.constant dense<0.000000e+00> : vector<4x8xf32>
    %35 = vector.multi_reduction <add>, %34, %cst_11 [2] : vector<4x8x32xf32> to vector<4x8xf32>
    %36 = math.exp %35 : vector<4x8xf32>
    %cst_12 = arith.constant dense<0.000000e+00> : vector<4xf32>
    %37 = vector.multi_reduction <add>, %36, %cst_12 [1] : vector<4x8xf32> to vector<4xf32>
    %38 = vector.shape_cast %37 : vector<4xf32> to vector<4x1xf32>
    %39 = tpu.reciprocal %38 : vector<4x1xf32> -> vector<4x1xf32>
    %40 = vector.broadcast %39 : vector<4x1xf32> to vector<4x8xf32>
    %41 = arith.mulf %36, %40 : vector<4x8xf32>
    %42 = vector.shape_cast %41 : vector<4x8xf32> to vector<4x8x1xf32>
    %43 = vector.broadcast %42 : vector<4x8x1xf32> to vector<4x8x32xf32>
    %44 = arith.mulf %43, %17 : vector<4x8x32xf32>
    %cst_13 = arith.constant dense<0.000000e+00> : vector<4x32xf32>
    %45 = vector.multi_reduction <add>, %44, %cst_13 [1] : vector<4x8x32xf32> to vector<4x32xf32>
    %46 = arith.mulf %45, %45 : vector<4x32xf32>
    %cst_14 = arith.constant dense<0.000000e+00> : vector<4xf32>
    %47 = vector.multi_reduction <add>, %46, %cst_14 [1] : vector<4x32xf32> to vector<4xf32>
    %48 = vector.shape_cast %47 : vector<4xf32> to vector<4x1xf32>
    %49 = math.rsqrt %48 : vector<4x1xf32>
    %50 = arith.mulf %49, %48 : vector<4x1xf32>
    %cst_15 = arith.constant 1.000000e+00 : f32
    %51 = vector.broadcast %cst_15 : f32 to vector<4x1xf32>
    %52 = arith.addf %51, %48 : vector<4x1xf32>
    %53 = tpu.reciprocal %52 : vector<4x1xf32> -> vector<4x1xf32>
    %54 = arith.mulf %50, %53 : vector<4x1xf32>
    %55 = vector.broadcast %54 : vector<4x1xf32> to vector<4x32xf32>
    %56 = arith.mulf %45, %55 : vector<4x32xf32>
    %57 = vector.shape_cast %56 : vector<4x32xf32> to vector<4x1x32xf32>
    %58 = vector.broadcast %57 : vector<4x1x32xf32> to vector<4x8x32xf32>
    %59 = arith.mulf %17, %58 : vector<4x8x32xf32>
    %cst_16 = arith.constant dense<0.000000e+00> : vector<4x8xf32>
    %60 = vector.multi_reduction <add>, %59, %cst_16 [2] : vector<4x8x32xf32> to vector<4x8xf32>
    %61 = arith.addf %35, %60 : vector<4x8xf32>
    %62 = math.exp %61 : vector<4x8xf32>
    %cst_17 = arith.constant dense<0.000000e+00> : vector<4xf32>
    %63 = vector.multi_reduction <add>, %62, %cst_17 [1] : vector<4x8xf32> to vector<4xf32>
    %64 = vector.shape_cast %63 : vector<4xf32> to vector<4x1xf32>
    %65 = tpu.reciprocal %64 : vector<4x1xf32> -> vector<4x1xf32>
    %66 = vector.broadcast %65 : vector<4x1xf32> to vector<4x8xf32>
    %67 = arith.mulf %62, %66 : vector<4x8xf32>
    %68 = vector.shape_cast %67 : vector<4x8xf32> to vector<4x8x1xf32>
    %69 = vector.broadcast %68 : vector<4x8x1xf32> to vector<4x8x32xf32>
    %70 = arith.mulf %69, %17 : vector<4x8x32xf32>
    %cst_18 = arith.constant dense<0.000000e+00> : vector<4x32xf32>
    %71 = vector.multi_reduction <add>, %70, %cst_18 [1] : vector<4x8x32xf32> to vector<4x32xf32>
    %72 = arith.mulf %71, %71 : vector<4x32xf32>
    %cst_19 = arith.constant dense<0.000000e+00> : vector<4xf32>
    %73 = vector.multi_reduction <add>, %72, %cst_19 [1] : vector<4x32xf32> to vector<4xf32>
    %74 = vector.shape_cast %73 : vector<4xf32> to vector<4x1xf32>
    %75 = math.rsqrt %74 : vector<4x1xf32>
    %76 = arith.mulf %75, %74 : vector<4x1xf32>
    %cst_20 = arith.constant 1.000000e+00 : f32
    %77 = vector.broadcast %cst_20 : f32 to vector<4x1xf32>
    %78 = arith.addf %77, %74 : vector<4x1xf32>
    %79 = tpu.reciprocal %78 : vector<4x1xf32> -> vector<4x1xf32>
    %80 = arith.mulf %76, %79 : vector<4x1xf32>
    %81 = vector.broadcast %80 : vector<4x1xf32> to vector<4x32xf32>
    %82 = arith.mulf %71, %81 : vector<4x32xf32>
    %c0_21 = arith.constant 0 : index
    %c0_22 = arith.constant 0 : index
    %83 = vector.load %arg3[%c0_21, %c0_22] : memref<4x32xf32, #tpu.memory_space<vmem>>, vector<4x32xf32>
    tpu.vector_store %arg3[%c0_21, %c0_22], %82 {strides = array<i32>} : memref<4x32xf32, #tpu.memory_space<vmem>>, vector<4x32xf32>,
    return
  }
}

</mosaic_0001>

<llo_original>
// kernel: induction_forward.1
$region0: #{induction_forward.1}
  #allocation0 [shape = 'u32[]', space=smem, size = 0x4, offset = 0x4, fixed_abs, tag = 'smem constant byte address 0x4 - core index']
  #allocation1 [shape = 'u32[144,128]{1,0:T(1,128)}', space=vmem, size = 0x12000, scoped, tag = 'internal scratch']
  %s0 = inlined_call_operand.hbm [shape: f32[32,32], index: 0, kind: input, shape index: {}]
  %s1 = inlined_call_operand.hbm [shape: f32[32,32], index: 1, kind: input, shape index: {}]
  %s2 = inlined_call_operand.vmem [shape: f32[1,32], index: 2, kind: input, shape index: {}]
  %s3 = inlined_call_operand.hbm [shape: f32[4,32], index: 3, kind: output, shape index: {}]
  %s4 = sld [smem:[#allocation0]]
  $region30: #{induction_forward.1} parent=0
    _
  %s6 = ssub.s32 1, %s4
  %s7 = scalar_select 0, %s6, %s4
  $region1: #{induction_forward.1} parent=0
    #allocation2 [shape = 'u8[16384]{0}', space=vmem, size = 0x4000, scoped, tag = 'input window, operand 0, single buffered']
    #allocation3 [shape = 's32[1]{0}', space=sflag, size = 0x4, scoped, tag = 'scoped memory for induction_forward.1']
    #allocation4 [shape = 's32[1]{0}', space=sflag, size = 0x4, scoped, tag = 'scoped memory for induction_forward.1']
    #allocation5 [shape = 'u8[16384]{0}', space=vmem, size = 0x4000, scoped, tag = 'input window, operand 1, single buffered']
    #allocation6 [shape = 's32[1]{0}', space=sflag, size = 0x4, scoped, tag = 'scoped memory for induction_forward.1']
    #allocation7 [shape = 'u8[2048]{0}', space=vmem, size = 0x800, scoped, tag = 'output window, operand 0, single buffered']
    %8 = vsyncpa [#allocation3], 0
    %9 = vsyncpa [#allocation6], 0
    %10 = vsyncpa [#allocation4], 0
    // Predicated region
    $region2: #{induction_forward.1} parent=1 // pred_check
      _
    $region3: #{induction_forward.1} parent=1 // pred_check_branch
      %12 = sbr.rel (0) target = $region5
    $region4: #{induction_forward.1} parent=1 // pred_region
      %s14 = ssub.s32 512, 512
      %15 = vsyncadd [#allocation3], %s14
      %s16 = sshll.u32 [#allocation2], 4
      %s17 = int_to_ptr.vmem [resolvable:$true] %s16
      %22 = dma.hbm_to_vmem [thread:$0]  %s0, 512, %s17, [#allocation3], 128, 128, 8
    $region5: #{induction_forward.1} parent=1 // pred_fallthru
      _
    // Predicated region
    $region6: #{induction_forward.1} parent=1 // pred_check
      _
    $region7: #{induction_forward.1} parent=1 // pred_check_branch
      %24 = sbr.rel (0) target = $region9
    $region8: #{induction_forward.1} parent=1 // pred_region
      %s26 = ssub.s32 512, 512
      %27 = vsyncadd [#allocation6], %s26
      %s28 = sshll.u32 [#allocation5], 4
      %s29 = int_to_ptr.vmem [resolvable:$true] %s28
      %34 = dma.hbm_to_vmem [thread:$0]  %s1, 512, %s29, [#allocation6], 128, 128, 8
    $region9: #{induction_forward.1} parent=1 // pred_fallthru
      _
    // Predicated region
    $region10: #{induction_forward.1} parent=1 // pred_check
      _
    $region11: #{induction_forward.1} parent=1 // pred_check_branch
      %36 = sbr.rel (0) target = $region13
    $region12: #{induction_forward.1} parent=1 // pred_region
      _
    $region13: #{induction_forward.1} parent=1 // pred_fallthru
      _
    // Predicated region
    $region14: #{induction_forward.1} parent=1 // pred_check
      _
    $region15: #{induction_forward.1} parent=1 // pred_check_branch
      %38 = sbr.rel (0) target = $region17
    $region16: #{induction_forward.1} parent=1 // pred_region
      %39 = dma.done [#allocation3], 512
    $region17: #{induction_forward.1} parent=1 // pred_fallthru
      _
    // Predicated region
    $region18: #{induction_forward.1} parent=1 // pred_check
      _
    $region19: #{induction_forward.1} parent=1 // pred_check_branch
      %41 = sbr.rel (0) target = $region21
    $region20: #{induction_forward.1} parent=1 // pred_region
      %42 = dma.done [#allocation6], 512
    $region21: #{induction_forward.1} parent=1 // pred_fallthru
      _
    %v43 = vld [vmem:[#allocation2] sm:$0xff]
    %v44 = vld [vmem:[#allocation2 + $0x8] sm:$0xff]
    %v45 = vld [vmem:[#allocation2 + $0x10] sm:$0xff]
    %v46 = vld [vmem:[#allocation2 + $0x18] sm:$0xff]
    %v47 = vld [vmem:[#allocation5] sm:$0xff]
    %v48 = vld [vmem:[#allocation5 + $0x8] sm:$0xff]
    %v49 = vld [vmem:[#allocation5 + $0x10] sm:$0xff]
    %v50 = vld [vmem:[#allocation5 + $0x18] sm:$0xff]
    %v51 = vld [vmem:[%s2] sm:$0x1]
    %v53 = vlaneseq
    %v54 = vshrl.u32 %v53, 7
    %v55 = vsub.s32 0, %v54
    %v56 = vrot.slane %v51, %v55
    %vm58 = vcmask 261120
    %v60 = vsel %vm58, %v43, 0
    %v63 = vsel %vm58, %v44, 0
    %v66 = vsel %vm58, %v45, 0
    %v69 = vsel %vm58, %v46, 0
    %v72 = vsel %vm58, %v47, 0
    %v75 = vsel %vm58, %v48, 0
    %v78 = vsel %vm58, %v49, 0
    %v81 = vsel %vm58, %v50, 0
    %83 = vmatprep.subr.mxu0 0.0
    %84 = vmatpush1.xpose.msra.mxu0 0.0
    %85 = vmatprep.subr.mxu0 0.0
    %86 = vmatpush1.xpose.msra.mxu0 0.0
    %87 = vmatprep.subr.mxu0 0.0
    %88 = vmatpush1.xpose.msra.mxu0 0.0
    %89 = vmatprep.subr.mxu0 0.0
    %90 = vmatpush1.xpose.msra.mxu0 0.0
    %91 = vmatprep.subr.mxu0 0.0
    %92 = vmatpush1.xpose.msra.mxu0 0.0
    %93 = vmatprep.subr.mxu0 0.0
    %94 = vmatpush1.xpose.msra.mxu0 0.0
    %95 = vmatprep.subr.mxu0 0.0
    %96 = vmatpush1.xpose.msra.mxu0 0.0
    %97 = vmatprep.subr.mxu0 0.0
    %98 = vmatpush1.xpose.msra.mxu0 0.0
    %99 = vmatprep.subr.mxu0 0.0
    %100 = vmatpush1.xpose.msra.mxu0 0.0
    %101 = vmatprep.subr.mxu0 0.0
    %102 = vmatpush1.xpose.msra.mxu0 0.0
    %103 = vmatprep.subr.mxu0 0.0
    %104 = vmatpush1.xpose.msra.mxu0 0.0
    %105 = vmatprep.subr.mxu0 0.0
    %106 = vmatpush1.xpose.msra.mxu0 0.0
    %107 = vmatprep.subr.mxu0 0.0
    %108 = vmatpush1.xpose.msra.mxu0 %v81
    %109 = vmatprep.subr.mxu0 0.0
    %110 = vmatpush1.xpose.msra.mxu0 %v78
    %111 = vmatprep.subr.mxu0 0.0
    %112 = vmatpush1.xpose.msra.mxu0 %v75
    %113 = vmatprep.subr.mxu0 0.0
    %114 = vmatpush1.xpose.msra.mxu0 %v72
    %115 = vmatprep.subr.mxu0 0.0
    %116 = vmatpush2.xpose.msra.mxu0 0.0
    %117 = vmatprep.subr.mxu0 0.0
    %118 = vmatpush2.xpose.msra.mxu0 0.0
    %119 = vmatprep.subr.mxu0 0.0
    %120 = vmatpush2.xpose.msra.mxu0 0.0
    %121 = vmatprep.subr.mxu0 0.0
    %122 = vmatpush2.xpose.msra.mxu0 0.0
    %123 = vmatprep.subr.mxu0 0.0
    %124 = vmatpush2.xpose.msra.mxu0 0.0
    %125 = vmatprep.subr.mxu0 0.0
    %126 = vmatpush2.xpose.msra.mxu0 0.0
    %127 = vmatprep.subr.mxu0 0.0
    %128 = vmatpush2.xpose.msra.mxu0 0.0
    %129 = vmatprep.subr.mxu0 0.0
    %130 = vmatpush2.xpose.msra.mxu0 0.0
    %131 = vmatprep.subr.mxu0 0.0
    %132 = vmatpush2.xpose.msra.mxu0 0.0
    %133 = vmatprep.subr.mxu0 0.0
    %134 = vmatpush2.xpose.msra.mxu0 0.0
    %135 = vmatprep.subr.mxu0 0.0
    %136 = vmatpush2.xpose.msra.mxu0 0.0
    %137 = vmatprep.subr.mxu0 0.0
    %138 = vmatpush2.xpose.msra.mxu0 0.0
    %139 = vmatprep.subr.mxu0 0.0
    %140 = vmatpush2.xpose.msra.mxu0 0.0
    %141 = vmatprep.subr.mxu0 0.0
    %142 = vmatpush2.xpose.msra.mxu0 0.0
    %143 = vmatprep.subr.mxu0 0.0
    %144 = vmatpush2.xpose.msra.mxu0 0.0
    %145 = vmatprep.subr.mxu0 0.0
    %146 = vmatpush2.xpose.msra.mxu0 0.0
    %147 = vmatprep.mubr.f32.mxu0 0.0
    %148 = vmatmul.mubr.f32.gmra.mxu0 %v60
    %v149 = vpop.f32.mrf.mxu0
    %v150 = vadd.f32 %v56, %v149
    %v151 = vpop.f32.mrf.mxu0
    %152 = vmatprep.mubr.f32.mxu0 0.0
    %153 = vmatmul.mubr.f32.gmra.mxu0 %v63
    %v154 = vpop.f32.mrf.mxu0
    %v155 = vadd.f32 %v56, %v154
    %v156 = vpop.f32.mrf.mxu0
    %157 = vmatprep.mubr.f32.mxu0 0.0
    %158 = vmatmul.mubr.f32.gmra.mxu0 %v66
    %v159 = vpop.f32.mrf.mxu0
    %v160 = vadd.f32 %v56, %v159
    %v161 = vpop.f32.mrf.mxu0
    %162 = vmatprep.mubr.f32.mxu0 0.0
    %163 = vmatmul.mubr.f32.gmra.mxu0 %v69
    %v164 = vpop.f32.mrf.mxu0
    %v165 = vadd.f32 %v56, %v164
    %v166 = vpop.f32.mrf.mxu0
    %167 = vdwg.mxu0
    %v168 = vmul.f32 %v150, %v150
    %v169 = vmul.f32 %v155, %v155
    %v170 = vmul.f32 %v160, %v160
    %v171 = vmul.f32 %v165, %v165
    %v172 = vsel %vm58, %v168, 0.0
    %173 = vadd.xlane.f32.xlu0 %v172
    %v174 = vpop.xlane.xlu0 %173
    %v175 = vsel %vm58, %v169, 0.0
    %176 = vadd.xlane.f32.xlu0 %v175
    %v177 = vpop.xlane.xlu0 %176
    %v178 = vsel %vm58, %v170, 0.0
    %179 = vadd.xlane.f32.xlu0 %v178
    %v180 = vpop.xlane.xlu0 %179
    %v181 = vsel %vm58, %v171, 0.0
    %182 = vadd.xlane.f32.xlu0 %v181
    %v183 = vpop.xlane.xlu0 %182
    %v184 = vrsqrt.pop %v174
    %v185 = vrsqrt.pop %v177
    %v186 = vrsqrt.pop %v180
    %v187 = vrsqrt.pop %v183
    %v188 = vmul.f32 %v184, %v174
    %v189 = vmul.f32 %v185, %v177
    %v190 = vmul.f32 %v186, %v180
    %v191 = vmul.f32 %v187, %v183
    %v192 = vadd.f32 %v174, 1.0
    %v193 = vadd.f32 %v177, 1.0
    %v194 = vadd.f32 %v180, 1.0
    %v195 = vadd.f32 %v183, 1.0
    %v196 = vrcp.pop %v192
    %v197 = vrcp.pop %v193
    %v198 = vrcp.pop %v194
    %v199 = vrcp.pop %v195
    %v200 = vmul.f32 %v188, %v196
    %v201 = vmul.f32 %v189, %v197
    %v202 = vmul.f32 %v190, %v198
    %v203 = vmul.f32 %v191, %v199
    %v204 = vmul.f32 %v150, %v200
    %v205 = vmul.f32 %v155, %v201
    %v206 = vmul.f32 %v160, %v202
    %v207 = vmul.f32 %v165, %v203
    %v208 = vsel %vm58, %v204, 0.0
    %v209 = vrot.slane %v208, 4
    %v210 = vadd.f32 %v208, %v209
    %v211 = vrot.slane %v210, 2
    %v212 = vadd.f32 %v210, %v211
    %v213 = vrot.slane %v212, 1
    %v214 = vadd.f32 %v212, %v213
    %v215 = vsel %vm58, %v205, 0.0
    %v216 = vrot.slane %v215, 4
    %v217 = vadd.f32 %v215, %v216
    %v218 = vrot.slane %v217, 2
    %v219 = vadd.f32 %v217, %v218
    %v220 = vrot.slane %v219, 1
    %v221 = vadd.f32 %v219, %v220
    %v222 = vsel %vm58, %v206, 0.0
    %v223 = vrot.slane %v222, 4
    %v224 = vadd.f32 %v222, %v223
    %v225 = vrot.slane %v224, 2
    %v226 = vadd.f32 %v224, %v225
    %v227 = vrot.slane %v226, 1
    %v228 = vadd.f32 %v226, %v227
    %v229 = vsel %vm58, %v207, 0.0
    %v230 = vrot.slane %v229, 4
    %v231 = vadd.f32 %v229, %v230
    %v232 = vrot.slane %v231, 2
    %v233 = vadd.f32 %v231, %v232
    %v234 = vrot.slane %v233, 1
    %v235 = vadd.f32 %v233, %v234
    %v236 = vrcp.pop 8.0
    %v237 = vmul.f32 %v214, %v236
    %v238 = vmul.f32 %v221, %v236
    %v239 = vmul.f32 %v228, %v236
    %v240 = vmul.f32 %v235, %v236
    %v241 = vmul.f32 %v237, %v237
    %v242 = vmul.f32 %v238, %v238
    %v243 = vmul.f32 %v239, %v239
    %v244 = vmul.f32 %v240, %v240
    %vm249 = vcmask 1041409
    %v250 = vsel %vm249, %v242, %v241
    %vm251 = vcmask 1042434
    %v252 = vsel %vm251, %v243, %v250
    %vm253 = vcmask 1043459
    %v254 = vsel %vm253, %v244, %v252
    %vm256 = vcmask 257024
    %v257 = vsel %vm256, %v254, 0.0
    %258 = vadd.xlane.f32.xlu0 %v257
    %v259 = vpop.xlane.xlu0 %258
    %v260 = vrsqrt.pop %v259
    %v261 = vmul.f32 %v260, %v259
    %v262 = vadd.f32 %v259, 1.0
    %v263 = vrcp.pop %v262
    %v264 = vmul.f32 %v261, %v263
    %v266 = vrot.slane %v264, 1
    %v267 = vrot.slane %v264, 2
    %v268 = vrot.slane %v264, 3
    %v273 = vmul.f32 %v237, %v264
    %v274 = vmul.f32 %v238, %v266
    %v275 = vmul.f32 %v239, %v267
    %v276 = vmul.f32 %v240, %v268
    %v277 = vlaneseq
    %v278 = vshrl.u32 %v277, 7
    %v279 = vsub.s32 0, %v278
    %v280 = vrot.slane %v273, %v279
    %v281 = vlaneseq
    %v282 = vshrl.u32 %v281, 7
    %v283 = vsub.s32 0, %v282
    %v284 = vrot.slane %v274, %v283
    %v285 = vlaneseq
    %v286 = vshrl.u32 %v285, 7
    %v287 = vsub.s32 0, %v286
    %v288 = vrot.slane %v275, %v287
    %v289 = vlaneseq
    %v290 = vshrl.u32 %v289, 7
    %v291 = vsub.s32 0, %v290
    %v292 = vrot.slane %v276, %v291
    %v293 = vmul.f32 %v204, %v280
    %v294 = vmul.f32 %v205, %v284
    %v295 = vmul.f32 %v206, %v288
    %v296 = vmul.f32 %v207, %v292
    %v297 = vsel %vm58, %v293, 0.0
    %298 = vadd.xlane.f32.xlu0 %v297
    %v299 = vpop.xlane.xlu0 %298
    %v300 = vsel %vm58, %v294, 0.0
    %301 = vadd.xlane.f32.xlu0 %v300
    %v302 = vpop.xlane.xlu0 %301
    %v303 = vsel %vm58, %v295, 0.0
    %304 = vadd.xlane.f32.xlu0 %v303
    %v305 = vpop.xlane.xlu0 %304
    %v306 = vsel %vm58, %v296, 0.0
    %307 = vadd.xlane.f32.xlu0 %v306
    %v308 = vpop.xlane.xlu0 %307
    %v309 = vmul.f32 %v299, 1.442695
    %v310 = vpow.pop %v309
    %v311 = vmul.f32 %v302, 1.442695
    %v312 = vpow.pop %v311
    %v313 = vmul.f32 %v305, 1.442695
    %v314 = vpow.pop %v313
    %v315 = vmul.f32 %v308, 1.442695
    %v316 = vpow.pop %v315
    %v321 = vlaneseq
    %v322 = vand.u32 %v321, 127
    %v323 = vlaneseq
    %v324 = vshrl.u32 %v323, 7
    %v325 = vsub.s32 %v322, %v324
    %v326 = vrot.slane %v310, %v325
    %v327 = vlaneseq
    %v328 = vshrl.u32 %v327, 7
    %v329 = vsub.s32 %v322, %v328
    %v330 = vrot.slane %v312, %v329
    %v331 = vlaneseq
    %v332 = vshrl.u32 %v331, 7
    %v333 = vsub.s32 %v322, %v332
    %v334 = vrot.slane %v314, %v333
    %v335 = vlaneseq
    %v336 = vshrl.u32 %v335, 7
    %v337 = vsub.s32 %v322, %v336
    %v338 = vrot.slane %v316, %v337
    %v339 = vsel %vm249, %v330, %v326
    %v340 = vsel %vm251, %v334, %v339
    %v341 = vsel %vm253, %v338, %v340
    %vm343 = vcmask 60416
    %v344 = vsel %vm343, %v341, 0.0
    %345 = vadd.xlane.f32.xlu0 %v344
    %v346 = vpop.xlane.xlu0 %345
    %v347 = vrcp.pop %v346
    %v349 = vlaneseq
    %v350 = vshrl.u32 %v349, 7
    %v351 = vsub.s32 0, %v350
    %v352 = vrot.slane %v347, %v351
    %v353 = vlaneseq
    %v354 = vshrl.u32 %v353, 7
    %v355 = vsub.s32 1, %v354
    %v356 = vrot.slane %v347, %v355
    %v357 = vlaneseq
    %v358 = vshrl.u32 %v357, 7
    %v359 = vsub.s32 2, %v358
    %v360 = vrot.slane %v347, %v359
    %v361 = vlaneseq
    %v362 = vshrl.u32 %v361, 7
    %v363 = vsub.s32 3, %v362
    %v364 = vrot.slane %v347, %v363
    %v369 = vmul.f32 %v310, %v352
    %v370 = vmul.f32 %v312, %v356
    %v371 = vmul.f32 %v314, %v360
    %v372 = vmul.f32 %v316, %v364
    %374 = vset.pattern.permute.xlu0 0
    %375 = vperm.xlu0 %374, %v369
    %v376 = vpop.permute.xlu0 %375
    %379 = vset.pattern.permute.xlu0 0
    %380 = vperm.xlu0 %379, %v370
    %v381 = vpop.permute.xlu0 %380
    %384 = vset.pattern.permute.xlu0 0
    %385 = vperm.xlu0 %384, %v371
    %v386 = vpop.permute.xlu0 %385
    %389 = vset.pattern.permute.xlu0 0
    %390 = vperm.xlu0 %389, %v372
    %v391 = vpop.permute.xlu0 %390
    %v393 = vmul.f32 %v376, %v204
    %v394 = vmul.f32 %v381, %v205
    %v395 = vmul.f32 %v386, %v206
    %v396 = vmul.f32 %v391, %v207
    %v397 = vsel %vm58, %v393, 0.0
    %v398 = vrot.slane %v397, 4
    %v399 = vadd.f32 %v397, %v398
    %v400 = vrot.slane %v399, 2
    %v401 = vadd.f32 %v399, %v400
    %v402 = vrot.slane %v401, 1
    %v403 = vadd.f32 %v401, %v402
    %v404 = vsel %vm58, %v394, 0.0
    %v405 = vrot.slane %v404, 4
    %v406 = vadd.f32 %v404, %v405
    %v407 = vrot.slane %v406, 2
    %v408 = vadd.f32 %v406, %v407
    %v409 = vrot.slane %v408, 1
    %v410 = vadd.f32 %v408, %v409
    %v411 = vsel %vm58, %v395, 0.0
    %v412 = vrot.slane %v411, 4
    %v413 = vadd.f32 %v411, %v412
    %v414 = vrot.slane %v413, 2
    %v415 = vadd.f32 %v413, %v414
    %v416 = vrot.slane %v415, 1
    %v417 = vadd.f32 %v415, %v416
    %v418 = vsel %vm58, %v396, 0.0
    %v419 = vrot.slane %v418, 4
    %v420 = vadd.f32 %v418, %v419
    %v421 = vrot.slane %v420, 2
    %v422 = vadd.f32 %v420, %v421
    %v423 = vrot.slane %v422, 1
    %v424 = vadd.f32 %v422, %v423
    %v425 = vmul.f32 %v403, %v403
    %v426 = vmul.f32 %v410, %v410
    %v427 = vmul.f32 %v417, %v417
    %v428 = vmul.f32 %v424, %v424
    %v433 = vsel %vm249, %v426, %v425
    %v434 = vsel %vm251, %v427, %v433
    %v435 = vsel %vm253, %v428, %v434
    %v437 = vsel %vm256, %v435, 0.0
    %438 = vadd.xlane.f32.xlu0 %v437
    %v439 = vpop.xlane.xlu0 %438
    %v440 = vrsqrt.pop %v439
    %v441 = vmul.f32 %v440, %v439
    %v442 = vadd.f32 %v439, 1.0
    %v443 = vrcp.pop %v442
    %v444 = vmul.f32 %v441, %v443
    %v446 = vrot.slane %v444, 1
    %v447 = vrot.slane %v444, 2
    %v448 = vrot.slane %v444, 3
    %v453 = vmul.f32 %v403, %v444
    %v454 = vmul.f32 %v410, %v446
    %v455 = vmul.f32 %v417, %v447
    %v456 = vmul.f32 %v424, %v448
    %v457 = vlaneseq
    %v458 = vshrl.u32 %v457, 7
    %v459 = vsub.s32 0, %v458
    %v460 = vrot.slane %v453, %v459
    %v461 = vlaneseq
    %v462 = vshrl.u32 %v461, 7
    %v463 = vsub.s32 0, %v462
    %v464 = vrot.slane %v454, %v463
    %v465 = vlaneseq
    %v466 = vshrl.u32 %v465, 7
    %v467 = vsub.s32 0, %v466
    %v468 = vrot.slane %v455, %v467
    %v469 = vlaneseq
    %v470 = vshrl.u32 %v469, 7
    %v471 = vsub.s32 0, %v470
    %v472 = vrot.slane %v456, %v471
    %v473 = vmul.f32 %v204, %v460
    %v474 = vmul.f32 %v205, %v464
    %v475 = vmul.f32 %v206, %v468
    %v476 = vmul.f32 %v207, %v472
    %v477 = vsel %vm58, %v473, 0.0
    %478 = vadd.xlane.f32.xlu0 %v477
    %v479 = vpop.xlane.xlu0 %478
    %v480 = vsel %vm58, %v474, 0.0
    %481 = vadd.xlane.f32.xlu0 %v480
    %v482 = vpop.xlane.xlu0 %481
    %v483 = vsel %vm58, %v475, 0.0
    %484 = vadd.xlane.f32.xlu0 %v483
    %v485 = vpop.xlane.xlu0 %484
    %v486 = vsel %vm58, %v476, 0.0
    %487 = vadd.xlane.f32.xlu0 %v486
    %v488 = vpop.xlane.xlu0 %487
    %v489 = vadd.f32 %v299, %v479
    %v490 = vadd.f32 %v302, %v482
    %v491 = vadd.f32 %v305, %v485
    %v492 = vadd.f32 %v308, %v488
    %v493 = vmul.f32 %v489, 1.442695
    %v494 = vpow.pop %v493
    %v495 = vmul.f32 %v490, 1.442695
    %v496 = vpow.pop %v495
    %v497 = vmul.f32 %v491, 1.442695
    %v498 = vpow.pop %v497
    %v499 = vmul.f32 %v492, 1.442695
    %v500 = vpow.pop %v499
    %v505 = vlaneseq
    %v506 = vshrl.u32 %v505, 7
    %v507 = vsub.s32 %v322, %v506
    %v508 = vrot.slane %v494, %v507
    %v509 = vlaneseq
    %v510 = vshrl.u32 %v509, 7
    %v511 = vsub.s32 %v322, %v510
    %v512 = vrot.slane %v496, %v511
    %v513 = vlaneseq
    %v514 = vshrl.u32 %v513, 7
    %v515 = vsub.s32 %v322, %v514
    %v516 = vrot.slane %v498, %v515
    %v517 = vlaneseq
    %v518 = vshrl.u32 %v517, 7
    %v519 = vsub.s32 %v322, %v518
    %v520 = vrot.slane %v500, %v519
    %v521 = vsel %vm249, %v512, %v508
    %v522 = vsel %vm251, %v516, %v521
    %v523 = vsel %vm253, %v520, %v522
    %v525 = vsel %vm343, %v523, 0.0
    %526 = vadd.xlane.f32.xlu0 %v525
    %v527 = vpop.xlane.xlu0 %526
    %v528 = vrcp.pop %v527
    %v530 = vlaneseq
    %v531 = vshrl.u32 %v530, 7
    %v532 = vsub.s32 0, %v531
    %v533 = vrot.slane %v528, %v532
    %v534 = vlaneseq
    %v535 = vshrl.u32 %v534, 7
    %v536 = vsub.s32 1, %v535
    %v537 = vrot.slane %v528, %v536
    %v538 = vlaneseq
    %v539 = vshrl.u32 %v538, 7
    %v540 = vsub.s32 2, %v539
    %v541 = vrot.slane %v528, %v540
    %v542 = vlaneseq
    %v543 = vshrl.u32 %v542, 7
    %v544 = vsub.s32 3, %v543
    %v545 = vrot.slane %v528, %v544
    %v550 = vmul.f32 %v494, %v533
    %v551 = vmul.f32 %v496, %v537
    %v552 = vmul.f32 %v498, %v541
    %v553 = vmul.f32 %v500, %v545
    %555 = vset.pattern.permute.xlu0 0
    %556 = vperm.xlu0 %555, %v550
    %v557 = vpop.permute.xlu0 %556
    %560 = vset.pattern.permute.xlu0 0
    %561 = vperm.xlu0 %560, %v551
    %v562 = vpop.permute.xlu0 %561
    %565 = vset.pattern.permute.xlu0 0
    %566 = vperm.xlu0 %565, %v552
    %v567 = vpop.permute.xlu0 %566
    %570 = vset.pattern.permute.xlu0 0
    %571 = vperm.xlu0 %570, %v553
    %v572 = vpop.permute.xlu0 %571
    %v574 = vmul.f32 %v557, %v204
    %v575 = vmul.f32 %v562, %v205
    %v576 = vmul.f32 %v567, %v206
    %v577 = vmul.f32 %v572, %v207
    %v578 = vsel %vm58, %v574, 0.0
    %v579 = vrot.slane %v578, 4
    %v580 = vadd.f32 %v578, %v579
    %v581 = vrot.slane %v580, 2
    %v582 = vadd.f32 %v580, %v581
    %v583 = vrot.slane %v582, 1
    %v584 = vadd.f32 %v582, %v583
    %v585 = vsel %vm58, %v575, 0.0
    %v586 = vrot.slane %v585, 4
    %v587 = vadd.f32 %v585, %v586
    %v588 = vrot.slane %v587, 2
    %v589 = vadd.f32 %v587, %v588
    %v590 = vrot.slane %v589, 1
    %v591 = vadd.f32 %v589, %v590
    %v592 = vsel %vm58, %v576, 0.0
    %v593 = vrot.slane %v592, 4
    %v594 = vadd.f32 %v592, %v593
    %v595 = vrot.slane %v594, 2
    %v596 = vadd.f32 %v594, %v595
    %v597 = vrot.slane %v596, 1
    %v598 = vadd.f32 %v596, %v597
    %v599 = vsel %vm58, %v577, 0.0
    %v600 = vrot.slane %v599, 4
    %v601 = vadd.f32 %v599, %v600
    %v602 = vrot.slane %v601, 2
    %v603 = vadd.f32 %v601, %v602
    %v604 = vrot.slane %v603, 1
    %v605 = vadd.f32 %v603, %v604
    %v606 = vmul.f32 %v584, %v584
    %v607 = vmul.f32 %v591, %v591
    %v608 = vmul.f32 %v598, %v598
    %v609 = vmul.f32 %v605, %v605
    %v614 = vsel %vm249, %v607, %v606
    %v615 = vsel %vm251, %v608, %v614
    %v616 = vsel %vm253, %v609, %v615
    %v618 = vsel %vm256, %v616, 0.0
    %619 = vadd.xlane.f32.xlu0 %v618
    %v620 = vpop.xlane.xlu0 %619
    %v621 = vrsqrt.pop %v620
    %v622 = vmul.f32 %v621, %v620
    %v623 = vadd.f32 %v620, 1.0
    %v624 = vrcp.pop %v623
    %v625 = vmul.f32 %v622, %v624
    %v627 = vrot.slane %v625, 1
    %v628 = vrot.slane %v625, 2
    %v629 = vrot.slane %v625, 3
    %v634 = vmul.f32 %v584, %v625
    %v635 = vmul.f32 %v591, %v627
    %v636 = vmul.f32 %v598, %v628
    %v637 = vmul.f32 %v605, %v629
    %v642 = vrot.slane %v635, 7
    %v643 = vsel %vm249, %v642, %v634
    %v644 = vrot.slane %v636, 6
    %v645 = vsel %vm251, %v644, %v643
    %v646 = vrot.slane %v637, 5
    %v647 = vsel %vm253, %v646, %v645
    %649 = vst.msk [vmem:[#allocation7] sm:$0xf] %vm256, %v647
    // Predicated region
    $region22: #{induction_forward.1} parent=1 // pred_check
      _
    $region23: #{induction_forward.1} parent=1 // pred_check_branch
      %651 = sbr.rel (0) target = $region25
    $region24: #{induction_forward.1} parent=1 // pred_region
      %s653 = ssub.s32 64, 64
      %654 = vsyncadd [#allocation4], %s653
      %s656 = sshll.u32 [#allocation7], 4
      %s657 = int_to_ptr.vmem [resolvable:$true] %s656
      %659 = dma.vmem_to_hbm [thread:$0]  %s657, 64, %s3, [#allocation4]
    $region25: #{induction_forward.1} parent=1 // pred_fallthru
      _
    // Predicated region
    $region26: #{induction_forward.1} parent=1 // pred_check
      _
    $region27: #{induction_forward.1} parent=1 // pred_check_branch
      %661 = sbr.rel (0) target = $region29
    $region28: #{induction_forward.1} parent=1 // pred_region
      %662 = dma.done [#allocation4], 64
    $region29: #{induction_forward.1} parent=1 // pred_fallthru
      _
    %663 = vsyncpa [#allocation3], 1
    %664 = vsyncpa [#allocation6], 1
    %665 = vsyncpa [#allocation4], 1

</llo_original>
